<compile_context>
chip_gen: v5e
topology: v5e:2x2
jax: 0.10.0
libtpu: 0.0.40
codegen_flags: <defaults>
</compile_context>

<pallas_src>
import jax
import jax.numpy as jnp
from jax.experimental import pallas as pl
from jax.experimental.pallas import tpu as pltpu


def _round_up(x, m):
    return (x + m - 1) // m * m


def _leaky_relu(x, slope=0.2):
    return jnp.where(x >= 0, x, slope * x)


def discriminator_kernel(x_ref, w1_ref, b1_ref, w2_ref, b2_ref, w3_ref, b3_ref,
                         out_ref):
    # x_ref: (TILE_B, F_pad) bf16      w1_ref: (F_pad, N_pad) bf16
    # w2_ref: (N_pad, N_pad) bf16      b1/b2/w3_ref: (1, N_pad) f32
    # b3_ref: (1, 1) f32               out_ref: (TILE_B, 1) f32
    # Linear 1 + LeakyReLU(0.2): bf16 MXU matmul, f32 accumulation.
    h1 = jnp.dot(x_ref[...], w1_ref[...], preferred_element_type=jnp.float32)
    h1 = _leaky_relu(h1 + b1_ref[...])

    # Linear 2 + LeakyReLU(0.2).
    h2 = jnp.dot(h1.astype(jnp.bfloat16), w2_ref[...],
                 preferred_element_type=jnp.float32)
    h2 = _leaky_relu(h2 + b2_ref[...])

    # Linear 3 (out_features=1) + Sigmoid: done as VPU multiply + lane reduce
    # instead of a 1-column MXU matmul (which would waste the MXU / hit the
    # masked result path).
    logits = jnp.sum(h2 * w3_ref[...], axis=-1, keepdims=True) + b3_ref[...]
    out_ref[...] = jax.nn.sigmoid(logits).astype(out_ref.dtype)


def discriminator_forward(x, params, *, tile_b=None):
    """x: (B, C, H, W) NCHW with C*H*W == image_size**2 (C=1 in practice)."""
    w1, b1, w2, b2, w3, b3 = params
    feat, ndf = w1.shape
    x_flat = x.reshape(-1, feat)                 # == torch .view(-1, F)
    batch = x_flat.shape[0]

    # Lane-aligned padded sizes (exact semantics: zero pads flow through
    # LeakyReLU as zeros and the padded w3 rows are zero).
    f_pad = _round_up(feat, 128)
    n_pad = _round_up(ndf, 128)
    if tile_b is None:
        # Multiple of 16 (bf16 sublane packing); ~256 rows/step for large B so
        # the x DMA pipelines against compute; small batches stay small.
        tile_b = min(256, _round_up(batch, 16))
    b_pad = _round_up(batch, tile_b)

    xp = jnp.pad(x_flat, ((0, b_pad - batch), (0, f_pad - feat))).astype(jnp.bfloat16)
    w1p = jnp.pad(w1, ((0, f_pad - feat), (0, n_pad - ndf))).astype(jnp.bfloat16)
    w2p = jnp.pad(w2, ((0, n_pad - ndf), (0, n_pad - ndf))).astype(jnp.bfloat16)
    b1p = jnp.pad(b1.reshape(1, ndf), ((0, 0), (0, n_pad - ndf)))
    b2p = jnp.pad(b2.reshape(1, ndf), ((0, 0), (0, n_pad - ndf)))
    w3p = jnp.pad(w3.reshape(1, ndf), ((0, 0), (0, n_pad - ndf)))   # (ndf,1)->(1,ndf) row
    b3p = b3.reshape(1, 1)

    grid = (b_pad // tile_b,)
    resident = lambda shape: pl.BlockSpec(shape, lambda i: (0, 0))  # stays in VMEM

    out = pl.pallas_call(
        discriminator_kernel,
        out_shape=jax.ShapeDtypeStruct((b_pad, 1), jnp.float32),
        grid=grid,
        in_specs=[
            pl.BlockSpec((tile_b, f_pad), lambda i: (i, 0)),   # streamed x tile
            resident((f_pad, n_pad)),                          # w1
            resident((1, n_pad)),                              # b1
            resident((n_pad, n_pad)),                          # w2
            resident((1, n_pad)),                              # b2
            resident((1, n_pad)),                              # w3 (as a row)
            resident((1, 1)),                                  # b3
        ],
        out_specs=pl.BlockSpec((tile_b, 1), lambda i: (i, 0)),
        compiler_params=pltpu.CompilerParams(
            dimension_semantics=("parallel",)),                # megacore on v7x
    )(xp, w1p, b1p, w2p, b2p, w3p, b3p)
    return out[:batch]


def init_params(key, image_size, ndf):
    feat = image_size * image_size
    ks = jax.random.split(key, 6)
    # Deterministic init; weights stored as (in, out) so kernel does x @ W.
    w1 = jax.random.normal(ks[0], (feat, ndf), jnp.float32) * 0.05
    b1 = jax.random.normal(ks[1], (1, ndf), jnp.float32) * 0.05
    w2 = jax.random.normal(ks[2], (ndf, ndf), jnp.float32) * 0.05
    b2 = jax.random.normal(ks[3], (1, ndf), jnp.float32) * 0.05
    w3 = jax.random.normal(ks[4], (ndf, 1), jnp.float32) * 0.05
    b3 = jax.random.normal(ks[5], (1, 1), jnp.float32) * 0.05
    return (w1, b1, w2, b2, w3, b3)


def reference_forward_matched(x, params):
    """Same math as the kernel: bf16 matmul inputs, f32 accumulation."""
    w1, b1, w2, b2, w3, b3 = params
    feat = w1.shape[0]
    h = x.reshape(-1, feat)
    h1 = _leaky_relu(jnp.dot(h.astype(jnp.bfloat16), w1.astype(jnp.bfloat16),
                             preferred_element_type=jnp.float32) + b1)
    h2 = _leaky_relu(jnp.dot(h1.astype(jnp.bfloat16), w2.astype(jnp.bfloat16),
                             preferred_element_type=jnp.float32) + b2)
    return jax.nn.sigmoid(jnp.dot(h2, w3) + b3)


def reference_forward_f32(x, params):
    """Pure f32 reference matching the PyTorch module."""
    w1, b1, w2, b2, w3, b3 = params
    feat = w1.shape[0]
    h = x.reshape(-1, feat)
    h = _leaky_relu(h @ w1 + b1)
    h = _leaky_relu(h @ w2 + b2)
    return jax.nn.sigmoid(h @ w3 + b3)


if __name__ == "__main__":
    image_size = 16
    ndf = 32
    batch = 2

    key = jax.random.PRNGKey(0)
    k_x, k_p = jax.random.split(key)
    x = jax.random.normal(k_x, (batch, 1, image_size, image_size), jnp.float32)
    params = init_params(k_p, image_size, ndf)

    out = jax.block_until_ready(discriminator_forward(x, params))

    ref = reference_forward_matched(x, params)
    ref_f32 = reference_forward_f32(x, params)
    assert out.shape == (batch, 1), out.shape
    assert jnp.allclose(out, ref, atol=1e-4, rtol=1e-4), (out, ref)
    assert jnp.allclose(out, ref_f32, atol=3e-2, rtol=3e-2), (out, ref_f32)
    print("KERNEL_OK")
</pallas_src>

<mosaic_0001>
module attributes {stable_mosaic.version = 11 : i64} {
  func.func @discriminator_kernel(%arg0: i32, %arg1: memref<16x256xbf16, #tpu.memory_space<vmem>>, %arg2: memref<256x128xbf16, #tpu.memory_space<vmem>>, %arg3: memref<1x128xf32, #tpu.memory_space<vmem>>, %arg4: memref<128x128xbf16, #tpu.memory_space<vmem>>, %arg5: memref<1x128xf32, #tpu.memory_space<vmem>>, %arg6: memref<1x128xf32, #tpu.memory_space<vmem>>, %arg7: memref<1x1xf32, #tpu.memory_space<vmem>>, %arg8: memref<16x1xf32, #tpu.memory_space<vmem>>) attributes {dimension_semantics = [#tpu.dimension_semantics<parallel>], iteration_bounds = array<i64: 1>, scalar_prefetch = 0 : i64, scratch_operands = 0 : i64, tpu.core_type = #tpu.core_type<tc>, window_params = [{transform_indices = @transform_0, window_bounds = array<i64: 16, 256>}, {pipeline_mode = #tpu.pipeline_mode<synchronous>, transform_indices = @transform_1, window_bounds = array<i64: 256, 128>}, {pipeline_mode = #tpu.pipeline_mode<synchronous>, transform_indices = @transform_2, window_bounds = array<i64: 1, 128>}, {pipeline_mode = #tpu.pipeline_mode<synchronous>, transform_indices = @transform_3, window_bounds = array<i64: 128, 128>}, {pipeline_mode = #tpu.pipeline_mode<synchronous>, transform_indices = @transform_4, window_bounds = array<i64: 1, 128>}, {pipeline_mode = #tpu.pipeline_mode<synchronous>, transform_indices = @transform_5, window_bounds = array<i64: 1, 128>}, {pipeline_mode = #tpu.pipeline_mode<synchronous>, transform_indices = @transform_6, window_bounds = array<i64: 1, 1>}, {transform_indices = @transform_7, window_bounds = array<i64: 16, 1>}]} {
    %c0 = arith.constant 0 : index
    %c0_0 = arith.constant 0 : index
    %0 = vector.load %arg1[%c0, %c0_0] : memref<16x256xbf16, #tpu.memory_space<vmem>>, vector<16x256xbf16>
    %c0_1 = arith.constant 0 : index
    %c0_2 = arith.constant 0 : index
    %1 = vector.load %arg2[%c0_1, %c0_2] : memref<256x128xbf16, #tpu.memory_space<vmem>>, vector<256x128xbf16>
    %cst = arith.constant dense<0.000000e+00> : vector<16x128xf32>
    %2 = tpu.matmul %0, %1, %cst {dimension_numbers = #tpu.dot_dimension_numbers<[1], [0], [0], [1], [0, 0, 1, 1], [], []>} : vector<16x256xbf16>, vector<256x128xbf16>, vector<16x128xf32> -> vector<16x128xf32>
    %c0_3 = arith.constant 0 : index
    %c0_4 = arith.constant 0 : index
    %3 = vector.load %arg3[%c0_3, %c0_4] : memref<1x128xf32, #tpu.memory_space<vmem>>, vector<1x128xf32>
    %4 = vector.broadcast %3 : vector<1x128xf32> to vector<16x128xf32>
    %5 = arith.addf %2, %4 : vector<16x128xf32>
    %cst_5 = arith.constant 0.000000e+00 : f32
    %6 = vector.broadcast %cst_5 : f32 to vector<16x128xf32>
    %7 = arith.cmpf oge, %5, %6 : vector<16x128xf32>
    %cst_6 = arith.constant 2.000000e-01 : f32
    %8 = vector.broadcast %cst_6 : f32 to vector<16x128xf32>
    %9 = arith.mulf %8, %5 : vector<16x128xf32>
    %10 = arith.select %7, %5, %9 : vector<16x128xi1>, vector<16x128xf32>
    %11 = arith.truncf %10 : vector<16x128xf32> to vector<16x128xbf16>
    %c0_7 = arith.constant 0 : index
    %c0_8 = arith.constant 0 : index
    %12 = vector.load %arg4[%c0_7, %c0_8] : memref<128x128xbf16, #tpu.memory_space<vmem>>, vector<128x128xbf16>
    %cst_9 = arith.constant dense<0.000000e+00> : vector<16x128xf32>
    %13 = tpu.matmul %11, %12, %cst_9 {dimension_numbers = #tpu.dot_dimension_numbers<[1], [0], [0], [1], [0, 0, 1, 1], [], []>} : vector<16x128xbf16>, vector<128x128xbf16>, vector<16x128xf32> -> vector<16x128xf32>
    %c0_10 = arith.constant 0 : index
    %c0_11 = arith.constant 0 : index
    %14 = vector.load %arg5[%c0_10, %c0_11] : memref<1x128xf32, #tpu.memory_space<vmem>>, vector<1x128xf32>
    %15 = vector.broadcast %14 : vector<1x128xf32> to vector<16x128xf32>
    %16 = arith.addf %13, %15 : vector<16x128xf32>
    %cst_12 = arith.constant 0.000000e+00 : f32
    %17 = vector.broadcast %cst_12 : f32 to vector<16x128xf32>
    %18 = arith.cmpf oge, %16, %17 : vector<16x128xf32>
    %cst_13 = arith.constant 2.000000e-01 : f32
    %19 = vector.broadcast %cst_13 : f32 to vector<16x128xf32>
    %20 = arith.mulf %19, %16 : vector<16x128xf32>
    %21 = arith.select %18, %16, %20 : vector<16x128xi1>, vector<16x128xf32>
    %c0_14 = arith.constant 0 : index
    %c0_15 = arith.constant 0 : index
    %22 = vector.load %arg6[%c0_14, %c0_15] : memref<1x128xf32, #tpu.memory_space<vmem>>, vector<1x128xf32>
    %23 = vector.broadcast %22 : vector<1x128xf32> to vector<16x128xf32>
    %24 = arith.mulf %21, %23 : vector<16x128xf32>
    %cst_16 = arith.constant dense<0.000000e+00> : vector<16xf32>
    %25 = vector.multi_reduction <add>, %24, %cst_16 [1] : vector<16x128xf32> to vector<16xf32>
    %26 = vector.shape_cast %25 : vector<16xf32> to vector<16x1xf32>
    %c0_17 = arith.constant 0 : index
    %c0_18 = arith.constant 0 : index
    %27 = vector.load %arg7[%c0_17, %c0_18] : memref<1x1xf32, #tpu.memory_space<vmem>>, vector<1x1xf32>
    %28 = vector.broadcast %27 : vector<1x1xf32> to vector<16x1xf32>
    %29 = arith.addf %26, %28 : vector<16x1xf32>
    %30 = arith.negf %29 : vector<16x1xf32>
    %31 = math.exp %30 : vector<16x1xf32>
    %cst_19 = arith.constant 1.000000e+00 : f32
    %32 = vector.broadcast %cst_19 : f32 to vector<16x1xf32>
    %33 = arith.addf %32, %31 : vector<16x1xf32>
    %34 = arith.divf %32, %33 : vector<16x1xf32>
    %c0_20 = arith.constant 0 : index
    %c0_21 = arith.constant 0 : index
    %35 = vector.load %arg8[%c0_20, %c0_21] : memref<16x1xf32, #tpu.memory_space<vmem>>, vector<16x1xf32>
    tpu.vector_store %arg8[%c0_20, %c0_21], %34 {strides = array<i32>} : memref<16x1xf32, #tpu.memory_space<vmem>>, vector<16x1xf32>,
    return
  }
  func.func @transform_0(%arg0: i32) -> (i32, i32) {
    %c0_i32 = arith.constant 0 : i32
    %c0_i32_0 = arith.constant 0 : i32
    return %arg0, %c0_i32 : i32, i32
  }
  func.func @transform_1(%arg0: i32) -> (i32, i32) {
    %c0_i32 = arith.constant 0 : i32
    %c0_i32_0 = arith.constant 0 : i32
    %c0_i32_1 = arith.constant 0 : i32
    return %c0_i32, %c0_i32_0 : i32, i32
  }
  func.func @transform_2(%arg0: i32) -> (i32, i32) {
    %c0_i32 = arith.constant 0 : i32
    %c0_i32_0 = arith.constant 0 : i32
    %c0_i32_1 = arith.constant 0 : i32
    return %c0_i32, %c0_i32_0 : i32, i32
  }
  func.func @transform_3(%arg0: i32) -> (i32, i32) {
    %c0_i32 = arith.constant 0 : i32
    %c0_i32_0 = arith.constant 0 : i32
    %c0_i32_1 = arith.constant 0 : i32
    return %c0_i32, %c0_i32_0 : i32, i32
  }
  func.func @transform_4(%arg0: i32) -> (i32, i32) {
    %c0_i32 = arith.constant 0 : i32
    %c0_i32_0 = arith.constant 0 : i32
    %c0_i32_1 = arith.constant 0 : i32
    return %c0_i32, %c0_i32_0 : i32, i32
  }
  func.func @transform_5(%arg0: i32) -> (i32, i32) {
    %c0_i32 = arith.constant 0 : i32
    %c0_i32_0 = arith.constant 0 : i32
    %c0_i32_1 = arith.constant 0 : i32
    return %c0_i32, %c0_i32_0 : i32, i32
  }
  func.func @transform_6(%arg0: i32) -> (i32, i32) {
    %c0_i32 = arith.constant 0 : i32
    %c0_i32_0 = arith.constant 0 : i32
    %c0_i32_1 = arith.constant 0 : i32
    return %c0_i32, %c0_i32_0 : i32, i32
  }
  func.func @transform_7(%arg0: i32) -> (i32, i32) {
    %c0_i32 = arith.constant 0 : i32
    %c0_i32_0 = arith.constant 0 : i32
    return %arg0, %c0_i32 : i32, i32
  }
}

</mosaic_0001>

<llo_original>
// kernel: tpu_custom_call.1
$region0: #{tpu_custom_call.1}
  #allocation0 [shape = 'u32[]', space=smem, size = 0x4, offset = 0x4, fixed_abs, tag = 'smem constant byte address 0x4 - core index']
  #allocation1 [shape = 'u32[72,128]{1,0:T(1,128)}', space=vmem, size = 0x9000, scoped, tag = 'internal scratch']
  #allocation2 [shape = 'f32[1,1]{1,0:T(1,128)S(1)}', space=vmem, size = 0x200, scoped, tag = 'scoped memory for tpu_custom_call.1']
  %s0 = inlined_call_operand.hbm [shape: bf16[16,256], index: 0, kind: input, shape index: {}]
  %s1 = inlined_call_operand.hbm [shape: bf16[256,128], index: 1, kind: input, shape index: {}]
  %s2 = inlined_call_operand.vmem [shape: f32[1,128], index: 2, kind: input, shape index: {}]
  %s3 = inlined_call_operand.hbm [shape: bf16[128,128], index: 3, kind: input, shape index: {}]
  %s4 = inlined_call_operand.vmem [shape: f32[1,128], index: 4, kind: input, shape index: {}]
  %s5 = inlined_call_operand.vmem [shape: f32[1,128], index: 5, kind: input, shape index: {}]
  %s6 = inlined_call_operand.<no memory space> [shape: f32[1,1], index: 6, kind: input, shape index: {}]
  %s7 = inlined_call_operand.vmem [shape: f32[16,1], index: 7, kind: output, shape index: {}]
  %s8 = sld [smem:[#allocation0]]
  $region50: #{tpu_custom_call.1} parent=0
    _
  %s10 = ssub.s32 1, %s8
  %s11 = scalar_select 0, %s10, %s8
  %v12 = vstv %s6
  %13 = vst [vmem:[#allocation2] sm:$0x1] %v12
  $region1: #{tpu_custom_call.1} parent=0
    #allocation3 [shape = 'u8[8192]{0}', space=vmem, size = 0x2000, scoped, tag = 'input window, operand 0, single buffered']
    #allocation4 [shape = 's32[1]{0}', space=sflag, size = 0x4, scoped, tag = 'scoped memory for tpu_custom_call.1']
    #allocation5 [shape = 'u8[65536]{0}', space=vmem, size = 0x10000, scoped, tag = 'input window, operand 1, single buffered']
    #allocation6 [shape = 's32[1]{0}', space=sflag, size = 0x4, scoped, tag = 'scoped memory for tpu_custom_call.1']
    #allocation7 [shape = 'u8[32768]{0}', space=vmem, size = 0x8000, scoped, tag = 'input window, operand 3, single buffered']
    %14 = vsyncpa [#allocation4], 0
    %15 = vsyncpa [#allocation6], 0
    // Predicated region
    $region2: #{tpu_custom_call.1} parent=1 // pred_check
      _
    $region3: #{tpu_custom_call.1} parent=1 // pred_check_branch
      %17 = sbr.rel (0) target = $region5
    $region4: #{tpu_custom_call.1} parent=1 // pred_region
      %19 = vsyncadd [#allocation4], 0
      %s20 = sshll.u32 %s0, 4
      %s21 = int_to_ptr.hbm [resolvable:$true] %s20
      %s22 = sshll.u32 [#allocation3], 4
      %s23 = int_to_ptr.vmem [resolvable:$true] %s22
      %28 = dma.hbm_to_vmem [thread:$0]  %s21, 256, %s23, [#allocation4], 128, 128, 8
    $region5: #{tpu_custom_call.1} parent=1 // pred_fallthru
      _
    // Predicated region
    $region6: #{tpu_custom_call.1} parent=1 // pred_check
      _
    $region7: #{tpu_custom_call.1} parent=1 // pred_check_branch
      %30 = sbr.rel (0) target = $region9
    $region8: #{tpu_custom_call.1} parent=1 // pred_region
      %32 = vsyncadd [#allocation6], 0
      %s33 = sshll.u32 %s1, 4
      %s34 = int_to_ptr.hbm [resolvable:$true] %s33
      %s35 = sshll.u32 [#allocation5], 4
      %s36 = int_to_ptr.vmem [resolvable:$true] %s35
      %41 = dma.hbm_to_vmem [thread:$0]  %s34, 2048, %s36, [#allocation6], 64, 64, 4
    $region9: #{tpu_custom_call.1} parent=1 // pred_fallthru
      _
    // Predicated region
    $region10: #{tpu_custom_call.1} parent=1 // pred_check
      _
    $region11: #{tpu_custom_call.1} parent=1 // pred_check_branch
      %43 = sbr.rel (0) target = $region13
    $region12: #{tpu_custom_call.1} parent=1 // pred_region
      _
    $region13: #{tpu_custom_call.1} parent=1 // pred_fallthru
      _
    // Predicated region
    $region14: #{tpu_custom_call.1} parent=1 // pred_check
      _
    $region15: #{tpu_custom_call.1} parent=1 // pred_check_branch
      %45 = sbr.rel (0) target = $region17
    $region16: #{tpu_custom_call.1} parent=1 // pred_region
      %47 = vsyncadd [#allocation6], 0
      %s48 = sshll.u32 %s3, 4
      %s49 = int_to_ptr.hbm [resolvable:$true] %s48
      %s50 = sshll.u32 [#allocation7], 4
      %s51 = int_to_ptr.vmem [resolvable:$true] %s50
      %56 = dma.hbm_to_vmem [thread:$0]  %s49, 1024, %s51, [#allocation6], 64, 64, 4
    $region17: #{tpu_custom_call.1} parent=1 // pred_fallthru
      _
    // Predicated region
    $region18: #{tpu_custom_call.1} parent=1 // pred_check
      _
    $region19: #{tpu_custom_call.1} parent=1 // pred_check_branch
      %58 = sbr.rel (0) target = $region21
    $region20: #{tpu_custom_call.1} parent=1 // pred_region
      _
    $region21: #{tpu_custom_call.1} parent=1 // pred_fallthru
      _
    // Predicated region
    $region22: #{tpu_custom_call.1} parent=1 // pred_check
      _
    $region23: #{tpu_custom_call.1} parent=1 // pred_check_branch
      %60 = sbr.rel (0) target = $region25
    $region24: #{tpu_custom_call.1} parent=1 // pred_region
      _
    $region25: #{tpu_custom_call.1} parent=1 // pred_fallthru
      _
    // Predicated region
    $region26: #{tpu_custom_call.1} parent=1 // pred_check
      _
    $region27: #{tpu_custom_call.1} parent=1 // pred_check_branch
      %62 = sbr.rel (0) target = $region29
    $region28: #{tpu_custom_call.1} parent=1 // pred_region
      _
    $region29: #{tpu_custom_call.1} parent=1 // pred_fallthru
      _
    // Predicated region
    $region30: #{tpu_custom_call.1} parent=1 // pred_check
      _
    $region31: #{tpu_custom_call.1} parent=1 // pred_check_branch
      %64 = sbr.rel (0) target = $region33
    $region32: #{tpu_custom_call.1} parent=1 // pred_region
      %66 = dma.done [#allocation4], 256
    $region33: #{tpu_custom_call.1} parent=1 // pred_fallthru
      _
    // Predicated region
    $region34: #{tpu_custom_call.1} parent=1 // pred_check
      _
    $region35: #{tpu_custom_call.1} parent=1 // pred_check_branch
      %68 = sbr.rel (0) target = $region37
    $region36: #{tpu_custom_call.1} parent=1 // pred_region
      %70 = dma.done [#allocation6], 2048
    $region37: #{tpu_custom_call.1} parent=1 // pred_fallthru
      _
    // Predicated region
    $region38: #{tpu_custom_call.1} parent=1 // pred_check
      _
    $region39: #{tpu_custom_call.1} parent=1 // pred_check_branch
      %72 = sbr.rel (0) target = $region41
    $region40: #{tpu_custom_call.1} parent=1 // pred_region
      %74 = dma.done [#allocation6], 1024
    $region41: #{tpu_custom_call.1} parent=1 // pred_fallthru
      _
    %v75 = vld [vmem:[#allocation3] sm:$0xff]
    %v76 = vld [vmem:[#allocation3 + $0x8] sm:$0xff]
    %v77 = vld [vmem:[#allocation5] sm:$0xf]
    %v78 = vld [vmem:[#allocation5 + $0x4] sm:$0xf]
    %v79 = vld [vmem:[#allocation5 + $0x8] sm:$0xf]
    %v80 = vld [vmem:[#allocation5 + $0xc] sm:$0xf]
    %v81 = vld [vmem:[#allocation5 + $0x10] sm:$0xf]
    %v82 = vld [vmem:[#allocation5 + $0x14] sm:$0xf]
    %v83 = vld [vmem:[#allocation5 + $0x18] sm:$0xf]
    %v84 = vld [vmem:[#allocation5 + $0x1c] sm:$0xf]
    %v85 = vld [vmem:[#allocation5 + $0x20] sm:$0xf]
    %v86 = vld [vmem:[#allocation5 + $0x24] sm:$0xf]
    %v87 = vld [vmem:[#allocation5 + $0x28] sm:$0xf]
    %v88 = vld [vmem:[#allocation5 + $0x2c] sm:$0xf]
    %v89 = vld [vmem:[#allocation5 + $0x30] sm:$0xf]
    %v90 = vld [vmem:[#allocation5 + $0x34] sm:$0xf]
    %v91 = vld [vmem:[#allocation5 + $0x38] sm:$0xf]
    %v92 = vld [vmem:[#allocation5 + $0x3c] sm:$0xf]
    %v93 = vld [vmem:[#allocation5 + $0x40] sm:$0xf]
    %v94 = vld [vmem:[#allocation5 + $0x44] sm:$0xf]
    %v95 = vld [vmem:[#allocation5 + $0x48] sm:$0xf]
    %v96 = vld [vmem:[#allocation5 + $0x4c] sm:$0xf]
    %v97 = vld [vmem:[#allocation5 + $0x50] sm:$0xf]
    %v98 = vld [vmem:[#allocation5 + $0x54] sm:$0xf]
    %v99 = vld [vmem:[#allocation5 + $0x58] sm:$0xf]
    %v100 = vld [vmem:[#allocation5 + $0x5c] sm:$0xf]
    %v101 = vld [vmem:[#allocation5 + $0x60] sm:$0xf]
    %v102 = vld [vmem:[#allocation5 + $0x64] sm:$0xf]
    %v103 = vld [vmem:[#allocation5 + $0x68] sm:$0xf]
    %v104 = vld [vmem:[#allocation5 + $0x6c] sm:$0xf]
    %v105 = vld [vmem:[#allocation5 + $0x70] sm:$0xf]
    %v106 = vld [vmem:[#allocation5 + $0x74] sm:$0xf]
    %v107 = vld [vmem:[#allocation5 + $0x78] sm:$0xf]
    %v108 = vld [vmem:[#allocation5 + $0x7c] sm:$0xf]
    %v109 = vld [vmem:[%s2] sm:$0x1]
    %v111 = vperm.slane %v109, 0
    %v115 = vunpack.c.l.b16 %v75
    %v116 = vunpack.c.h.b16 %v75
    %v117 = vunpack.c.l.b16 %v76
    %v118 = vunpack.c.h.b16 %v76
    %v119 = vpack.c.b16 %v117, %v115
    %v120 = vpack.c.b16 %v118, %v116
    %v155 = vunpack.c.l.b16 %v77
    %v156 = vunpack.c.l.b16 %v78
    %v157 = vunpack.c.l.b16 %v79
    %v158 = vunpack.c.l.b16 %v80
    %v159 = vunpack.c.l.b16 %v81
    %v160 = vunpack.c.l.b16 %v82
    %v161 = vunpack.c.l.b16 %v83
    %v162 = vunpack.c.l.b16 %v84
    %v163 = vunpack.c.l.b16 %v85
    %v164 = vunpack.c.l.b16 %v86
    %v165 = vunpack.c.l.b16 %v87
    %v166 = vunpack.c.l.b16 %v88
    %v167 = vunpack.c.l.b16 %v89
    %v168 = vunpack.c.l.b16 %v90
    %v169 = vunpack.c.l.b16 %v91
    %v170 = vunpack.c.l.b16 %v92
    %v171 = vunpack.c.l.b16 %v93
    %v172 = vunpack.c.l.b16 %v94
    %v173 = vunpack.c.l.b16 %v95
    %v174 = vunpack.c.l.b16 %v96
    %v175 = vunpack.c.l.b16 %v97
    %v176 = vunpack.c.l.b16 %v98
    %v177 = vunpack.c.l.b16 %v99
    %v178 = vunpack.c.l.b16 %v100
    %v179 = vunpack.c.l.b16 %v101
    %v180 = vunpack.c.l.b16 %v102
    %v181 = vunpack.c.l.b16 %v103
    %v182 = vunpack.c.l.b16 %v104
    %v183 = vunpack.c.l.b16 %v105
    %v184 = vunpack.c.l.b16 %v106
    %v185 = vunpack.c.l.b16 %v107
    %v186 = vunpack.c.l.b16 %v108
    %v187 = vpack.c.b16 %v156, %v155
    %v188 = vpack.c.b16 %v158, %v157
    %v189 = vpack.c.b16 %v160, %v159
    %v190 = vpack.c.b16 %v162, %v161
    %v191 = vpack.c.b16 %v164, %v163
    %v192 = vpack.c.b16 %v166, %v165
    %v193 = vpack.c.b16 %v168, %v167
    %v194 = vpack.c.b16 %v170, %v169
    %v195 = vpack.c.b16 %v172, %v171
    %v196 = vpack.c.b16 %v174, %v173
    %v197 = vpack.c.b16 %v176, %v175
    %v198 = vpack.c.b16 %v178, %v177
    %v199 = vpack.c.b16 %v180, %v179
    %v200 = vpack.c.b16 %v182, %v181
    %v201 = vpack.c.b16 %v184, %v183
    %v202 = vpack.c.b16 %v186, %v185
    %219 = vmatpush.bf16.msra.mxu0 %v194
    %220 = vmatpush.bf16.msra.mxu0 %v193
    %221 = vmatpush.bf16.msra.mxu0 %v192
    %222 = vmatpush.bf16.msra.mxu0 %v191
    %223 = vmatpush.bf16.msra.mxu0 %v190
    %224 = vmatpush.bf16.msra.mxu0 %v189
    %225 = vmatpush.bf16.msra.mxu0 %v188
    %226 = vmatpush.bf16.msra.mxu0 %v187
    %227 = vmatmul.bf16.gmra.mxu0 %v119
    %v228 = vpop.f32.mrf.mxu0
    %v229 = vadd.f32 %v111, %v228
    %v230 = vpop.f32.mrf.mxu0
    %v231 = vadd.f32 %v111, %v230
    %232 = vdwg.mxu0
    %233 = vmatpush.bf16.msra.mxu0 %v202
    %234 = vmatpush.bf16.msra.mxu0 %v201
    %235 = vmatpush.bf16.msra.mxu0 %v200
    %236 = vmatpush.bf16.msra.mxu0 %v199
    %237 = vmatpush.bf16.msra.mxu0 %v198
    %238 = vmatpush.bf16.msra.mxu0 %v197
    %239 = vmatpush.bf16.msra.mxu0 %v196
    %240 = vmatpush.bf16.msra.mxu0 %v195
    %241 = vmatmul.bf16.gmra.mxu0 %v120
    %v242 = vpop.f32.mrf.mxu0
    %v243 = vadd.f32 %v229, %v242
    %v244 = vpop.f32.mrf.mxu0
    %v245 = vadd.f32 %v231, %v244
    %246 = vdwg.mxu0
    %vm247 = vcmp.ge.f32.partialorder %v243, 0.0
    %vm248 = vcmp.ge.f32.partialorder %v245, 0.0
    %v249 = vmul.f32 %v243, 0.2
    %v250 = vmul.f32 %v245, 0.2
    %v251 = vsel %vm247, %v243, %v249
    %v252 = vsel %vm248, %v245, %v250
    %v253 = vpack.c.bf16 %v252, %v251
    %v254 = vld [vmem:[#allocation7] sm:$0xf]
    %v255 = vld [vmem:[#allocation7 + $0x4] sm:$0xf]
    %v256 = vld [vmem:[#allocation7 + $0x8] sm:$0xf]
    %v257 = vld [vmem:[#allocation7 + $0xc] sm:$0xf]
    %v258 = vld [vmem:[#allocation7 + $0x10] sm:$0xf]
    %v259 = vld [vmem:[#allocation7 + $0x14] sm:$0xf]
    %v260 = vld [vmem:[#allocation7 + $0x18] sm:$0xf]
    %v261 = vld [vmem:[#allocation7 + $0x1c] sm:$0xf]
    %v262 = vld [vmem:[#allocation7 + $0x20] sm:$0xf]
    %v263 = vld [vmem:[#allocation7 + $0x24] sm:$0xf]
    %v264 = vld [vmem:[#allocation7 + $0x28] sm:$0xf]
    %v265 = vld [vmem:[#allocation7 + $0x2c] sm:$0xf]
    %v266 = vld [vmem:[#allocation7 + $0x30] sm:$0xf]
    %v267 = vld [vmem:[#allocation7 + $0x34] sm:$0xf]
    %v268 = vld [vmem:[#allocation7 + $0x38] sm:$0xf]
    %v269 = vld [vmem:[#allocation7 + $0x3c] sm:$0xf]
    %v270 = vld [vmem:[%s4] sm:$0x1]
    %v272 = vperm.slane %v270, 0
    %v290 = vunpack.c.l.b16 %v254
    %v291 = vunpack.c.l.b16 %v255
    %v292 = vunpack.c.l.b16 %v256
    %v293 = vunpack.c.l.b16 %v257
    %v294 = vunpack.c.l.b16 %v258
    %v295 = vunpack.c.l.b16 %v259
    %v296 = vunpack.c.l.b16 %v260
    %v297 = vunpack.c.l.b16 %v261
    %v298 = vunpack.c.l.b16 %v262
    %v299 = vunpack.c.l.b16 %v263
    %v300 = vunpack.c.l.b16 %v264
    %v301 = vunpack.c.l.b16 %v265
    %v302 = vunpack.c.l.b16 %v266
    %v303 = vunpack.c.l.b16 %v267
    %v304 = vunpack.c.l.b16 %v268
    %v305 = vunpack.c.l.b16 %v269
    %v306 = vpack.c.b16 %v291, %v290
    %v307 = vpack.c.b16 %v293, %v292
    %v308 = vpack.c.b16 %v295, %v294
    %v309 = vpack.c.b16 %v297, %v296
    %v310 = vpack.c.b16 %v299, %v298
    %v311 = vpack.c.b16 %v301, %v300
    %v312 = vpack.c.b16 %v303, %v302
    %v313 = vpack.c.b16 %v305, %v304
    %322 = vmatpush.bf16.msra.mxu0 %v313
    %323 = vmatpush.bf16.msra.mxu0 %v312
    %324 = vmatpush.bf16.msra.mxu0 %v311
    %325 = vmatpush.bf16.msra.mxu0 %v310
    %326 = vmatpush.bf16.msra.mxu0 %v309
    %327 = vmatpush.bf16.msra.mxu0 %v308
    %328 = vmatpush.bf16.msra.mxu0 %v307
    %329 = vmatpush.bf16.msra.mxu0 %v306
    %330 = vmatmul.bf16.gmra.mxu0 %v253
    %v331 = vpop.f32.mrf.mxu0
    %v332 = vadd.f32 %v272, %v331
    %v333 = vpop.f32.mrf.mxu0
    %v334 = vadd.f32 %v272, %v333
    %335 = vdwg.mxu0
    %vm336 = vcmp.ge.f32.partialorder %v332, 0.0
    %vm337 = vcmp.ge.f32.partialorder %v334, 0.0
    %v338 = vmul.f32 %v332, 0.2
    %v339 = vmul.f32 %v334, 0.2
    %v340 = vsel %vm336, %v332, %v338
    %v341 = vsel %vm337, %v334, %v339
    %v342 = vld [vmem:[%s5] sm:$0x1]
    %v344 = vperm.slane %v342, 0
    %v346 = vmul.f32 %v340, %v344
    %v347 = vmul.f32 %v341, %v344
    %348 = vadd.xlane.f32.xlu0 %v346
    %v349 = vpop.xlane.xlu0 %348
    %350 = vadd.xlane.f32.xlu0 %v347
    %v351 = vpop.xlane.xlu0 %350
    %v352 = vld [vmem:[#allocation2] sm:$0x1]
    %v354 = vperm.slane %v352, 0
    %v356 = vadd.f32 %v349, %v354
    %v357 = vadd.f32 %v351, %v354
    %v358 = vxor.u32 %v356, 2147483648
    %v359 = vxor.u32 %v357, 2147483648
    %v360 = vmul.f32 %v358, 1.442695
    %v361 = vpow.pop %v360
    %v362 = vmul.f32 %v359, 1.442695
    %v363 = vpow.pop %v362
    %v364 = vadd.f32 %v361, 1.0
    %v365 = vadd.f32 %v363, 1.0
    %v366 = vrcp.pop %v364
    %v367 = vmul.f32 %v364, %v366
    %v368 = vsub.f32 1.0, %v367
    %v369 = vmul.f32 %v366, %v368
    %v370 = vadd.f32 %v366, %v369
    %vm371 = vweird.f32 %v364
    %vm372 = vweird.f32 %v366
    %vm373 = vmor %vm371, %vm372
    %v374 = vsel %vm373, %v366, %v370
    %v375 = vand.u32 2147483647, %v364
    %vm376 = vcmp.eq.f32.partialorder %v375, 8.507059e+37
    %v377 = vand.u32 %v364, 2147483648
    %v378 = vor.u32 1.1754944e-38, %v377
    %v379 = vsel %vm376, %v378, %v374
    %v380 = vmul.f32 1.0, %v379
    %v381 = vrcp.pop %v365
    %v382 = vmul.f32 %v365, %v381
    %v383 = vsub.f32 1.0, %v382
    %v384 = vmul.f32 %v381, %v383
    %v385 = vadd.f32 %v381, %v384
    %vm386 = vweird.f32 %v365
    %vm387 = vweird.f32 %v381
    %vm388 = vmor %vm386, %vm387
    %v389 = vsel %vm388, %v381, %v385
    %v390 = vand.u32 2147483647, %v365
    %vm391 = vcmp.eq.f32.partialorder %v390, 8.507059e+37
    %v392 = vand.u32 %v365, 2147483648
    %v393 = vor.u32 1.1754944e-38, %v392
    %v394 = vsel %vm391, %v393, %v389
    %v395 = vmul.f32 1.0, %v394
    %vm396 = vcmask 7168
    %397 = vst.msk [vmem:[%s7] sm:$0xff] %vm396, %v380
    %398 = vst.msk [vmem:[%s7 + $0x8] sm:$0xff] %vm396, %v395
    // Predicated region
    $region42: #{tpu_custom_call.1} parent=1 // pred_check
      _
    $region43: #{tpu_custom_call.1} parent=1 // pred_check_branch
      %400 = sbr.rel (0) target = $region45
    $region44: #{tpu_custom_call.1} parent=1 // pred_region
      _
    $region45: #{tpu_custom_call.1} parent=1 // pred_fallthru
      _
    // Predicated region
    $region46: #{tpu_custom_call.1} parent=1 // pred_check
      _
    $region47: #{tpu_custom_call.1} parent=1 // pred_check_branch
      %402 = sbr.rel (0) target = $region49
    $region48: #{tpu_custom_call.1} parent=1 // pred_region
      _
    $region49: #{tpu_custom_call.1} parent=1 // pred_fallthru
      _
    %403 = vsyncpa [#allocation4], 1
    %404 = vsyncpa [#allocation6], 1

</llo_original>
